<compile_context>
chip_gen: v7x
topology: tpu7x:2x2x1
jax: 0.10.0
libtpu: 0.0.40
codegen_flags: <defaults>
</compile_context>

<pallas_src>
import jax
import jax.numpy as jnp
from jax.experimental import pallas as pl
from jax.experimental.pallas import tpu as pltpu


# ---------------------------------------------------------------------------
# Kernels (blocks are (TN, 3, TH, TW); purely elementwise VPU/EUP work)
# ---------------------------------------------------------------------------
def _rgb2hsv_kernel(img_ref, out_ref):
    f32 = jnp.float32
    r = img_ref[:, 0, :, :].astype(f32)
    g = img_ref[:, 1, :, :].astype(f32)
    b = img_ref[:, 2, :, :].astype(f32)

    maxc = jnp.maximum(jnp.maximum(r, g), b)
    minc = jnp.minimum(jnp.minimum(r, g), b)

    eqc = maxc == minc
    cr = maxc - minc
    ones = jnp.ones_like(maxc)

    # reciprocal + multiply instead of divides
    s = cr * pl.reciprocal(jnp.where(eqc, ones, maxc), approx=False)
    inv_cr = pl.reciprocal(jnp.where(eqc, ones, cr), approx=False)
    rc = (maxc - r) * inv_cr
    gc = (maxc - g) * inv_cr
    bc = (maxc - b) * inv_cr

    # hoisted compares + jnp.where instead of (mask).astype * expr
    max_is_r = maxc == r
    max_is_g = maxc == g
    not_r = jnp.logical_not(max_is_r)
    hr = jnp.where(max_is_r, bc - gc, 0.0)
    hg = jnp.where(max_is_g & not_r, 2.0 + rc - bc, 0.0)
    hb = jnp.where(jnp.logical_not(max_is_g) & not_r, 4.0 + gc - rc, 0.0)
    h = (hr + hg + hb) * (1.0 / 6.0) + 1.0
    # torch.fmod(x, 1.0) == x - trunc(x)
    h = h - jnp.trunc(h)

    odt = out_ref.dtype
    out_ref[:, 0, :, :] = h.astype(odt)
    out_ref[:, 1, :, :] = s.astype(odt)
    out_ref[:, 2, :, :] = maxc.astype(odt)


def _hsv2rgb_kernel(img_ref, out_ref):
    f32 = jnp.float32
    h = img_ref[:, 0, :, :].astype(f32)
    s = img_ref[:, 1, :, :].astype(f32)
    v = img_ref[:, 2, :, :].astype(f32)

    h6 = h * 6.0
    i_f = jnp.floor(h6)
    f = h6 - i_f
    # torch: i = floor(h*6).int() % 6  (floored modulo, sign of divisor).
    # Exact float-domain equivalent (also correct for h outside [0, 1]),
    # avoiding a vector int32 modulo:
    i_f = i_f - 6.0 * jnp.floor(i_f * (1.0 / 6.0))

    p = jnp.clip(v * (1.0 - s), 0.0, 1.0)
    q = jnp.clip(v * (1.0 - s * f), 0.0, 1.0)
    t = jnp.clip(v * (1.0 - s * (1.0 - f)), 0.0, 1.0)

    # selection tables (torchvision):  i : 0  1  2  3  4  5
    #                                  R : v  q  p  p  t  v
    #                                  G : t  v  v  q  p  p
    #                                  B : p  p  t  v  v  q
    r_out = jnp.where(i_f < 1.0, v,
            jnp.where(i_f < 2.0, q,
            jnp.where(i_f < 4.0, p,
            jnp.where(i_f < 5.0, t, v))))
    g_out = jnp.where(i_f < 1.0, t,
            jnp.where(i_f < 3.0, v,
            jnp.where(i_f < 4.0, q, p)))
    b_out = jnp.where(i_f < 2.0, p,
            jnp.where(i_f < 3.0, t,
            jnp.where(i_f < 5.0, v, q)))

    odt = out_ref.dtype
    out_ref[:, 0, :, :] = r_out.astype(odt)
    out_ref[:, 1, :, :] = g_out.astype(odt)
    out_ref[:, 2, :, :] = b_out.astype(odt)


# ---------------------------------------------------------------------------
# Wrapper (the "module")
# ---------------------------------------------------------------------------
def _chip_tuning():
    """(per-block byte budget, explicit vmem limit or None) by TPU generation."""
    try:
        kind = jax.devices()[0].device_kind.lower()
    except Exception:
        kind = ""
    if "v5 lite" in kind or "v5e" in kind or "v5lite" in kind:
        # 16 MiB default scoped VMEM: 2 MiB blocks -> <= 8 MiB double-buffered.
        return 2 * 1024 * 1024, None
    if "v7" in kind:
        # 64 MiB VMEM per TC (32 MiB default scoped): keep buffers ~24 MiB.
        return 6 * 1024 * 1024, 32 * 1024 * 1024
    if "v6" in kind or "trillium" in kind:
        return 6 * 1024 * 1024, 48 * 1024 * 1024
    return 3 * 1024 * 1024, None  # unknown chip: conservative default


def convert_color(image, current="RGB", transform="HSV"):
    """Pallas equivalent of ConvertColor(current, transform).forward(image).

    image: float array of shape (N, 3, H, W).  For HSV->RGB, h is expected in
    the range produced by RGB->HSV (hue wraps via floored modulo 6).
    """
    if current == "RGB" and transform == "HSV":
        kernel = _rgb2hsv_kernel
        flops_per_px, transc_per_px = 40, 2
    elif current == "HSV" and transform == "RGB":
        kernel = _hsv2rgb_kernel
        flops_per_px, transc_per_px = 30, 0
    else:
        raise NotImplementedError

    N, C, H, W = image.shape
    assert C == 3, "ConvertColor expects 3-channel images"
    P = H * W
    itemsize = image.dtype.itemsize
    # sublane multiple for the dtype: (8,128) for 32-bit, (16,128) for 16-bit.
    sub = {4: 8, 2: 16, 1: 32}.get(itemsize, 8)

    block_budget, vmem_limit = _chip_tuning()

    # ---- layout: fold H*W into a lane-dense (rows, TW) slab, TW % 128 == 0 --
    TW = 1024 if P >= 8 * 1024 else 128
    rows = pl.cdiv(P, TW)
    P_pad = rows * TW

    # Row-tile height: either the whole slab (full-dim block, no masking) or a
    # multiple of `sub` sized to ~block_budget; ragged last tiles are left to
    # Pallas' boundary masking instead of padding rows up to a TH multiple.
    max_th = max(sub, (block_budget // (3 * TW * itemsize)) // sub * sub)
    TH = rows if rows <= max_th else max_th
    row_tiles = pl.cdiv(rows, TH)

    # Batch several images per block when one image fits a single tile, but
    # keep >= ~4 grid steps so v7x's two TensorCores stay busy and
    # double-buffering still overlaps DMA with compute.
    TN = 1
    if row_tiles == 1 and N > 1:
        per_img = 3 * TH * TW * itemsize
        max_tn = max(1, min(block_budget // max(per_img, 1), N // 4))
        TN = max(d for d in range(1, min(N, max_tn) + 1) if N % d == 0)

    flat = image.reshape(N, 3, P)
    if P_pad != P:
        # Only pad to a TW multiple (<= TW-1 extra pixels); the common
        # P % TW == 0 case (e.g. 224x224 with TW=1024) pays no pad/slice pass.
        # TODO(synk): a pl.ANY + manual make_async_copy path could remove this
        # residual pad/slice copy for ragged P entirely.
        flat = jnp.pad(flat, ((0, 0), (0, 0), (0, P_pad - P)))
    x = flat.reshape(N, 3, rows, TW)

    spec = pl.BlockSpec((TN, 3, TH, TW), lambda n, r: (n, 0, r, 0))
    n_px = N * H * W

    cp_kwargs = dict(dimension_semantics=("parallel", "parallel"))
    if vmem_limit is not None:
        cp_kwargs["vmem_limit_bytes"] = vmem_limit

    out = pl.pallas_call(
        kernel,
        out_shape=jax.ShapeDtypeStruct((N, 3, rows, TW), image.dtype),
        grid_spec=pltpu.PrefetchScalarGridSpec(
            num_scalar_prefetch=0,
            grid=(N // TN, row_tiles),
            in_specs=[spec],
            out_specs=spec,
        ),
        compiler_params=pltpu.CompilerParams(**cp_kwargs),
        cost_estimate=pl.CostEstimate(
            flops=flops_per_px * n_px,
            transcendentals=transc_per_px * n_px,
            bytes_accessed=2 * 3 * n_px * itemsize,
        ),
    )(x)

    out = out.reshape(N, 3, P_pad)
    if P_pad != P:
        out = out[:, :, :P]
    return out.reshape(N, 3, H, W)


# ---------------------------------------------------------------------------
# Pure-JAX reference for validation (torchvision semantics)
# ---------------------------------------------------------------------------
def _rgb2hsv_ref(img):
    r, g, b = img[:, 0], img[:, 1], img[:, 2]
    maxc = jnp.max(img, axis=1)
    minc = jnp.min(img, axis=1)
    eqc = maxc == minc
    cr = maxc - minc
    ones = jnp.ones_like(maxc)
    s = cr / jnp.where(eqc, ones, maxc)
    crd = jnp.where(eqc, ones, cr)
    rc, gc, bc = (maxc - r) / crd, (maxc - g) / crd, (maxc - b) / crd
    hr = (maxc == r) * (bc - gc)
    hg = ((maxc == g) & (maxc != r)) * (2.0 + rc - bc)
    hb = ((maxc != g) & (maxc != r)) * (4.0 + gc - rc)
    h = (hr + hg + hb) / 6.0 + 1.0
    h = h - jnp.trunc(h)
    return jnp.stack((h, s, maxc), axis=1)


def _assert_hsv_close(out, ref, atol, tag=""):
    # hue is circular on [0, 1): compare with wrap-aware distance
    dh = jnp.abs(out[:, 0] - ref[:, 0])
    dh = jnp.minimum(dh, 1.0 - dh)
    assert bool(jnp.all(dh <= atol)), f"hue mismatch {tag}"
    assert jnp.allclose(out[:, 1:], ref[:, 1:], atol=atol), f"sat/val mismatch {tag}"


if __name__ == "__main__":
    k1, k2, k3 = jax.random.split(jax.random.PRNGKey(0), 3)

    # NCHW RGB image in [0, 1]
    N, C, H, W = 2, 3, 16, 16
    x = jax.random.uniform(k1, (N, C, H, W), dtype=jnp.float32)

    hsv = jax.block_until_ready(convert_color(x, current="RGB", transform="HSV"))
    assert hsv.shape == (N, C, H, W)
    _assert_hsv_close(hsv, _rgb2hsv_ref(x), atol=3e-6, tag="16x16")

    rgb = jax.block_until_ready(convert_color(hsv, current="HSV", transform="RGB"))
    assert jnp.allclose(rgb, x, atol=1e-5), "round-trip mismatch"

    # Non-128-multiple spatial size exercises the (small) pad / slice path.
    x2 = jax.random.uniform(k2, (2, 3, 17, 23), dtype=jnp.float32)
    hsv2 = jax.block_until_ready(convert_color(x2, current="RGB", transform="HSV"))
    _assert_hsv_close(hsv2, _rgb2hsv_ref(x2), atol=3e-6, tag="17x23")
    rgb2 = jax.block_until_ready(convert_color(hsv2, current="HSV", transform="RGB"))
    assert jnp.allclose(rgb2, x2, atol=1e-5), "odd-shape round-trip mismatch"

    # 224x224 exercises TW=1024 with zero wrapper pad/slice and a full-slab
    # (non-multiple-of-8) row tile.
    x3 = jax.random.uniform(k3, (2, 3, 224, 224), dtype=jnp.float32)
    hsv3 = jax.block_until_ready(convert_color(x3, current="RGB", transform="HSV"))
    _assert_hsv_close(hsv3, _rgb2hsv_ref(x3), atol=3e-6, tag="224x224")

    # Reduced-precision I/O path (bf16 in/out, f32 math inside the kernel).
    xb = jax.random.uniform(k2, (2, 3, 64, 64), dtype=jnp.float32).astype(jnp.bfloat16)
    hsvb = jax.block_until_ready(convert_color(xb, current="RGB", transform="HSV"))
    _assert_hsv_close(hsvb.astype(jnp.float32),
                      _rgb2hsv_ref(xb.astype(jnp.float32)), atol=1e-2, tag="bf16")

    print("KERNEL_OK")
</pallas_src>

<mosaic_0001>
module attributes {stable_mosaic.version = 11 : i64} {
  func.func @_rgb2hsv_kernel(%arg0: i32, %arg1: i32, %arg2: memref<1x3x2x128xf32, #tpu.memory_space<vmem>>, %arg3: memref<1x3x2x128xf32, #tpu.memory_space<vmem>>) attributes {dimension_semantics = [#tpu.dimension_semantics<parallel>, #tpu.dimension_semantics<parallel>], iteration_bounds = array<i64: 2, 1>, scalar_prefetch = 0 : i64, scratch_operands = 0 : i64, tpu.core_type = #tpu.core_type<tc>, window_params = [{transform_indices = @transform_0, window_bounds = array<i64: 1, 3, 2, 128>}, {transform_indices = @transform_1, window_bounds = array<i64: 1, 3, 2, 128>}]} {
    %c0 = arith.constant 0 : index
    %c0_0 = arith.constant 0 : index
    %c0_1 = arith.constant 0 : index
    %c0_2 = arith.constant 0 : index
    %0 = vector.load %arg2[%c0, %c0_0, %c0_1, %c0_2] : memref<1x3x2x128xf32, #tpu.memory_space<vmem>>, vector<1x1x2x128xf32>
    %1 = vector.shape_cast %0 : vector<1x1x2x128xf32> to vector<1x2x128xf32>
    %c0_3 = arith.constant 0 : index
    %c1 = arith.constant 1 : index
    %c0_4 = arith.constant 0 : index
    %c0_5 = arith.constant 0 : index
    %2 = vector.load %arg2[%c0_3, %c1, %c0_4, %c0_5] : memref<1x3x2x128xf32, #tpu.memory_space<vmem>>, vector<1x1x2x128xf32>
    %3 = vector.shape_cast %2 : vector<1x1x2x128xf32> to vector<1x2x128xf32>
    %c0_6 = arith.constant 0 : index
    %c2 = arith.constant 2 : index
    %c0_7 = arith.constant 0 : index
    %c0_8 = arith.constant 0 : index
    %4 = vector.load %arg2[%c0_6, %c2, %c0_7, %c0_8] : memref<1x3x2x128xf32, #tpu.memory_space<vmem>>, vector<1x1x2x128xf32>
    %5 = vector.shape_cast %4 : vector<1x1x2x128xf32> to vector<1x2x128xf32>
    %6 = arith.maximumf %1, %3 : vector<1x2x128xf32>
    %7 = arith.maximumf %6, %5 : vector<1x2x128xf32>
    %8 = arith.minimumf %1, %3 : vector<1x2x128xf32>
    %9 = arith.minimumf %8, %5 : vector<1x2x128xf32>
    %10 = arith.cmpf oeq, %7, %9 : vector<1x2x128xf32>
    %11 = arith.subf %7, %9 : vector<1x2x128xf32>
    %cst = arith.constant 1.000000e+00 : f32
    %12 = vector.broadcast %cst : f32 to vector<1x2x128xf32>
    %13 = arith.select %10, %12, %7 : vector<1x2x128xi1>, vector<1x2x128xf32>
    %14 = tpu.reciprocal %13 : vector<1x2x128xf32> -> vector<1x2x128xf32>
    %15 = arith.mulf %11, %14 : vector<1x2x128xf32>
    %16 = arith.select %10, %12, %11 : vector<1x2x128xi1>, vector<1x2x128xf32>
    %17 = tpu.reciprocal %16 : vector<1x2x128xf32> -> vector<1x2x128xf32>
    %18 = arith.subf %7, %1 : vector<1x2x128xf32>
    %19 = arith.mulf %18, %17 : vector<1x2x128xf32>
    %20 = arith.subf %7, %3 : vector<1x2x128xf32>
    %21 = arith.mulf %20, %17 : vector<1x2x128xf32>
    %22 = arith.subf %7, %5 : vector<1x2x128xf32>
    %23 = arith.mulf %22, %17 : vector<1x2x128xf32>
    %24 = arith.cmpf oeq, %7, %1 : vector<1x2x128xf32>
    %25 = arith.cmpf oeq, %7, %3 : vector<1x2x128xf32>
    %cst_9 = arith.constant dense<true> : vector<1x2x128xi1>
    %26 = arith.xori %24, %cst_9 : vector<1x2x128xi1>
    %27 = arith.subf %23, %21 : vector<1x2x128xf32>
    %cst_10 = arith.constant 0.000000e+00 : f32
    %28 = vector.broadcast %cst_10 : f32 to vector<1x2x128xf32>
    %29 = arith.select %24, %27, %28 : vector<1x2x128xi1>, vector<1x2x128xf32>
    %30 = arith.andi %25, %26 : vector<1x2x128xi1>
    %cst_11 = arith.constant 2.000000e+00 : f32
    %31 = vector.broadcast %cst_11 : f32 to vector<1x2x128xf32>
    %32 = arith.addf %31, %19 : vector<1x2x128xf32>
    %33 = arith.subf %32, %23 : vector<1x2x128xf32>
    %cst_12 = arith.constant 0.000000e+00 : f32
    %34 = vector.broadcast %cst_12 : f32 to vector<1x2x128xf32>
    %35 = arith.select %30, %33, %34 : vector<1x2x128xi1>, vector<1x2x128xf32>
    %cst_13 = arith.constant dense<true> : vector<1x2x128xi1>
    %36 = arith.xori %25, %cst_13 : vector<1x2x128xi1>
    %37 = arith.andi %36, %26 : vector<1x2x128xi1>
    %cst_14 = arith.constant 4.000000e+00 : f32
    %38 = vector.broadcast %cst_14 : f32 to vector<1x2x128xf32>
    %39 = arith.addf %38, %21 : vector<1x2x128xf32>
    %40 = arith.subf %39, %19 : vector<1x2x128xf32>
    %cst_15 = arith.constant 0.000000e+00 : f32
    %41 = vector.broadcast %cst_15 : f32 to vector<1x2x128xf32>
    %42 = arith.select %37, %40, %41 : vector<1x2x128xi1>, vector<1x2x128xf32>
    %43 = arith.addf %29, %35 : vector<1x2x128xf32>
    %44 = arith.addf %43, %42 : vector<1x2x128xf32>
    %cst_16 = arith.constant 0.166666672 : f32
    %45 = vector.broadcast %cst_16 : f32 to vector<1x2x128xf32>
    %46 = arith.mulf %44, %45 : vector<1x2x128xf32>
    %cst_17 = arith.constant 1.000000e+00 : f32
    %47 = vector.broadcast %cst_17 : f32 to vector<1x2x128xf32>
    %48 = arith.addf %46, %47 : vector<1x2x128xf32>
    %cst_18 = arith.constant 0.000000e+00 : f32
    %49 = vector.broadcast %cst_18 : f32 to vector<1x2x128xf32>
    %50 = arith.cmpf olt, %48, %49 : vector<1x2x128xf32>
    %51 = math.ceil %48 : vector<1x2x128xf32>
    %52 = math.floor %48 : vector<1x2x128xf32>
    %53 = arith.select %50, %51, %52 : vector<1x2x128xi1>, vector<1x2x128xf32>
    %54 = arith.subf %48, %53 : vector<1x2x128xf32>
    %c0_19 = arith.constant 0 : index
    %c0_20 = arith.constant 0 : index
    %c0_21 = arith.constant 0 : index
    %c0_22 = arith.constant 0 : index
    %55 = vector.load %arg3[%c0_19, %c0_20, %c0_21, %c0_22] : memref<1x3x2x128xf32, #tpu.memory_space<vmem>>, vector<1x1x2x128xf32>
    %56 = vector.shape_cast %55 : vector<1x1x2x128xf32> to vector<1x2x128xf32>
    %57 = vector.shape_cast %54 : vector<1x2x128xf32> to vector<1x1x2x128xf32>
    tpu.vector_store %arg3[%c0_19, %c0_20, %c0_21, %c0_22], %57 {strides = array<i32>} : memref<1x3x2x128xf32, #tpu.memory_space<vmem>>, vector<1x1x2x128xf32>,
    %c0_23 = arith.constant 0 : index
    %c1_24 = arith.constant 1 : index
    %c0_25 = arith.constant 0 : index
    %c0_26 = arith.constant 0 : index
    %58 = vector.load %arg3[%c0_23, %c1_24, %c0_25, %c0_26] : memref<1x3x2x128xf32, #tpu.memory_space<vmem>>, vector<1x1x2x128xf32>
    %59 = vector.shape_cast %58 : vector<1x1x2x128xf32> to vector<1x2x128xf32>
    %60 = vector.shape_cast %15 : vector<1x2x128xf32> to vector<1x1x2x128xf32>
    tpu.vector_store %arg3[%c0_23, %c1_24, %c0_25, %c0_26], %60 {strides = array<i32>} : memref<1x3x2x128xf32, #tpu.memory_space<vmem>>, vector<1x1x2x128xf32>,
    %c0_27 = arith.constant 0 : index
    %c2_28 = arith.constant 2 : index
    %c0_29 = arith.constant 0 : index
    %c0_30 = arith.constant 0 : index
    %61 = vector.load %arg3[%c0_27, %c2_28, %c0_29, %c0_30] : memref<1x3x2x128xf32, #tpu.memory_space<vmem>>, vector<1x1x2x128xf32>
    %62 = vector.shape_cast %61 : vector<1x1x2x128xf32> to vector<1x2x128xf32>
    %63 = vector.shape_cast %7 : vector<1x2x128xf32> to vector<1x1x2x128xf32>
    tpu.vector_store %arg3[%c0_27, %c2_28, %c0_29, %c0_30], %63 {strides = array<i32>} : memref<1x3x2x128xf32, #tpu.memory_space<vmem>>, vector<1x1x2x128xf32>,
    return
  }
  func.func @transform_0(%arg0: i32, %arg1: i32) -> (i32, i32, i32, i32) {
    %c0_i32 = arith.constant 0 : i32
    %c0_i32_0 = arith.constant 0 : i32
    %c0_i32_1 = arith.constant 0 : i32
    return %arg0, %c0_i32, %arg1, %c0_i32_0 : i32, i32, i32, i32
  }
  func.func @transform_1(%arg0: i32, %arg1: i32) -> (i32, i32, i32, i32) {
    %c0_i32 = arith.constant 0 : i32
    %c0_i32_0 = arith.constant 0 : i32
    %c0_i32_1 = arith.constant 0 : i32
    return %arg0, %c0_i32, %arg1, %c0_i32_0 : i32, i32, i32, i32
  }
}

</mosaic_0001>

<llo_original>
// kernel: tpu_custom_call.1
$region0: #{tpu_custom_call.1}
  #allocation0 [shape = 'u32[]', space=smem, size = 0x4, offset = 0x4, fixed_abs, tag = 'smem constant byte address 0x4 - core index']
  #allocation1 [shape = 'u32[144,128]{1,0:T(1,128)}', space=vmem, size = 0x12000, scoped, tag = 'internal scratch']
  %s0 = inlined_call_operand.hbm [shape: f32[2,3,2,128], index: 0, kind: input, shape index: {}]
  %s1 = inlined_call_operand.hbm [shape: f32[2,3,2,128], index: 1, kind: output, shape index: {}]
  %s2 = sld [smem:[#allocation0]]
  $region41: #{tpu_custom_call.1} parent=0
    _
  %s4 = ssub.s32 1, %s2
  %s5 = scalar_select 0, %s4, %s2
  $region1: #{tpu_custom_call.1} parent=0
    #allocation2 [shape = 'u8[6144]{0}', space=vmem, size = 0x1800, scoped, tag = 'input window, operand 0']
    #allocation3 [shape = 's32[2]{0}', space=sflag, size = 0x8, scoped, tag = 'scoped memory for tpu_custom_call.1']
    #allocation4 [shape = 's32[2]{0}', space=sflag, size = 0x8, scoped, tag = 'scoped memory for tpu_custom_call.1']
    #allocation5 [shape = 'u8[6144]{0}', space=vmem, size = 0x1800, scoped, tag = 'output window, operand 0']
    %6 = vsyncpa [#allocation3], 0
    %s7 = scalar_lea.sflag [#allocation3], 1
    %8 = vsyncpa %s7, 0
    %9 = vsyncpa [#allocation4], 0
    %s10 = scalar_lea.sflag [#allocation4], 1
    %11 = vsyncpa %s10, 0
    loop: start=0, step=1, limit=4
    $region2: #{tpu_custom_call.1} parent=1 // loop_pre_header
      _
    $region3: #{tpu_custom_call.1} parent=1 // loop_header
      %s13 = sphi 0, %s17
      %p14 = scmp.ge.s32.totalorder %s13, 4
      %s20 = sphi 0, %s32
      %s21 = sphi 0, %s28
      %s22 = sphi 0, %s20
      %s23 = sphi 0, %s21
      %s24 = sphi 0, %s22
      %s25 = sphi 0, %s23
      %s37 = sphi 0, %s39
      %s40 = sphi 0, %s37
      %s41 = sphi 0, %s40
      %s57 = sphi 0, %s41
      %s65 = sphi 0, %s67
      %s68 = sphi 0, %s65
      %s69 = sphi 0, %s68
      %s85 = sphi 0, %s69
    $region4: #{tpu_custom_call.1} parent=1 // loop_header_branch
      %16 = sbr.rel (%p14) target = $region8
    $region5: #{tpu_custom_call.1} parent=1 // loop_body
      %s18 = ssub.s32 %s13, 1
      %s19 = ssub.s32 %s13, 2
      %s26 = sadd.s32 1, %s21
      %p27 = scmp.ge.s32.totalorder %s26, 1
      %s28 = scalar_select %p27, 0, %s26
      %s29 = sadd.s32 1, %s20
      %s30 = scalar_select %p27, %s29, %s20
      %p31 = scmp.ge.s32.totalorder %s30, 2
      %s32 = scalar_select %p31, 0, %s30
      %s33 = ssub.s32 %s20, %s32
      %s34 = ssub.s32 %s21, %s28
      %s35 = sor.u32 %s33, %s34
      %p36 = scmp.eq.s32.totalorder %s35, 0
      %s38 = sadd.s32 %s37, 1
      %s39 = scalar_select %p36, %s37, %s38
      %p42 = pneg %p36
      %p43 = scmp.eq.s32.totalorder %s13, 1
      %p44 = por %p42, %p43
      %p45 = scmp.ne.s32.totalorder %s37, %s40
      %p46 = scmp.eq.s32.totalorder %s13, 0
      %p47 = por %p45, %p46
      %p48 = scmp.ne.s32.totalorder %s37, %s40
      %p49 = scmp.eq.s32.totalorder %s18, 1
      %p50 = por %p48, %p49
      %p51 = scmp.ne.s32.totalorder %s40, %s41
      %p52 = scmp.eq.s32.totalorder %s18, 0
      %p53 = por %p51, %p52
      %p54 = scmp.ne.s32.totalorder %s40, %s41
      %p55 = scmp.eq.s32.totalorder %s19, 1
      %p56 = por %p54, %p55
      %p58 = scmp.ne.s32.totalorder %s41, %s57
      %p59 = scmp.eq.s32.totalorder %s19, 0
      %p60 = por %p58, %p59
      %s61 = ssub.s32 %s20, %s32
      %s62 = ssub.s32 %s21, %s28
      %s63 = sor.u32 %s61, %s62
      %p64 = scmp.eq.s32.totalorder %s63, 0
      %s66 = sadd.s32 %s65, 1
      %s67 = scalar_select %p64, %s65, %s66
      %p70 = pneg %p64
      %p71 = scmp.eq.s32.totalorder %s13, 1
      %p72 = por %p70, %p71
      %p73 = scmp.ne.s32.totalorder %s65, %s68
      %p74 = scmp.eq.s32.totalorder %s13, 0
      %p75 = por %p73, %p74
      %p76 = scmp.ne.s32.totalorder %s65, %s68
      %p77 = scmp.eq.s32.totalorder %s18, 1
      %p78 = por %p76, %p77
      %p79 = scmp.ne.s32.totalorder %s68, %s69
      %p80 = scmp.eq.s32.totalorder %s18, 0
      %p81 = por %p79, %p80
      %p82 = scmp.ne.s32.totalorder %s68, %s69
      %p83 = scmp.eq.s32.totalorder %s19, 1
      %p84 = por %p82, %p83
      %p86 = scmp.ne.s32.totalorder %s69, %s85
      %p87 = scmp.eq.s32.totalorder %s19, 0
      %p88 = por %p86, %p87
      %p89 = scmp.le.s32.totalorder 1, %s13
      %p90 = scmp.lt.s32.totalorder %s13, 3
      %p91 = pnand %p89, %p90
      %p92 = pneg %p91
      // Predicated region
      $region9: #{tpu_custom_call.1} parent=5 // pred_check
        _
      $region10: #{tpu_custom_call.1} parent=5 // pred_check_branch
        %94 = sbr.rel (%p91) target = $region12
      $region11: #{tpu_custom_call.1} parent=5 // pred_region
        %s95 = ssub.s32 %s13, 1
      $region12: #{tpu_custom_call.1} parent=5 // pred_fallthru
        _
      %p96 = scmp.lt.s32.totalorder %s13, 2
      // Predicated region
      $region13: #{tpu_custom_call.1} parent=5 // pred_check
        %p97 = pneg %p96
      $region14: #{tpu_custom_call.1} parent=5 // pred_check_branch
        %99 = sbr.rel (%p97) target = $region16
      $region15: #{tpu_custom_call.1} parent=5 // pred_region
        // Predicated region
        $region17: #{tpu_custom_call.1} parent=15 // pred_check
          %p100 = pneg %p47
        $region18: #{tpu_custom_call.1} parent=15 // pred_check_branch
          %102 = sbr.rel (%p100) target = $region20
        $region19: #{tpu_custom_call.1} parent=15 // pred_region
          %s103 = sand.u32 %s37, 1
          %s104 = scalar_lea.sflag [#allocation3], %s103
          %s105 = sand.u32 %s37, 1
          %s106 = smul.addr %s105, 6
          %s107 = scalar_lea.vmem [#allocation2], %s106
          %s109 = ssub.s32 96, 96
          %110 = vsyncadd %s104, %s109
          %s111 = smul.addr %s20, 3
          %s112 = sadd.s32 %s21, %s111
          %s113 = smul.addr %s112, 32
          %s114 = scalar_lea.hbm %s0, %s113
          %s115 = sshll.u32 %s107, 4
          %s116 = int_to_ptr.vmem [resolvable:$true] %s115
          %121 = dma.hbm_to_vmem [thread:$0]  %s114, 96, %s116, %s104, 32, 32, 2
        $region20: #{tpu_custom_call.1} parent=15 // pred_fallthru
          _
      $region16: #{tpu_custom_call.1} parent=5 // pred_fallthru
        _
      %p122 = scmp.le.s32.totalorder 1, %s13
      %p123 = scmp.lt.s32.totalorder %s13, 3
      %p124 = pnand %p122, %p123
      %p125 = pneg %p124
      // Predicated region
      $region21: #{tpu_custom_call.1} parent=5 // pred_check
        _
      $region22: #{tpu_custom_call.1} parent=5 // pred_check_branch
        %127 = sbr.rel (%p124) target = $region24
      $region23: #{tpu_custom_call.1} parent=5 // pred_region
        %s128 = ssub.s32 %s13, 1
        %s129 = sand.u32 %s40, 1
        %s130 = scalar_lea.sflag [#allocation3], %s129
        %s131 = sand.u32 %s40, 1
        %s132 = smul.addr %s131, 6
        %s133 = scalar_lea.vmem [#allocation2], %s132
        // Predicated region
        $region25: #{tpu_custom_call.1} parent=23 // pred_check
          %p134 = pneg %p53
        $region26: #{tpu_custom_call.1} parent=23 // pred_check_branch
          %136 = sbr.rel (%p134) target = $region28
        $region27: #{tpu_custom_call.1} parent=23 // pred_region
          %137 = dma.done %s130, 96
        $region28: #{tpu_custom_call.1} parent=23 // pred_fallthru
          _
        %s138 = sand.u32 %s40, 1
        %s139 = scalar_lea.sflag [#allocation3], %s138
        %s140 = sand.u32 %s40, 1
        %s141 = smul.addr %s140, 6
        %s142 = scalar_lea.vmem [#allocation2], %s141
        %p143 = pneg %p53
        %p144 = pneg %p50
        %p145 = pneg %p81
        %p146 = pneg %p78
        %s147 = sand.u32 %s68, 1
        %s148 = scalar_lea.sflag [#allocation4], %s147
        %s149 = sand.u32 %s68, 1
        %s150 = smul.addr %s149, 6
        %s151 = scalar_lea.vmem [#allocation5], %s150
        %v152 = vld [vmem:[%s133] sm:$0x3]
        %s153 = scalar_lea.vmem %s133, 2 [#allocation2]
        %v154 = vld [vmem:[%s153] sm:$0x3]
        %s155 = scalar_lea.vmem %s133, 4 [#allocation2]
        %v156 = vld [vmem:[%s155] sm:$0x3]
        %v157 = vmax.f32 %v152, %v154
        %v158 = vmax.f32 %v157, %v156
        %v159 = vmin.f32 %v152, %v154
        %v160 = vmin.f32 %v159, %v156
        %vm161 = vcmp.eq.f32.partialorder %v158, %v160
        %v162 = vsub.f32 %v158, %v160
        %v163 = vsel %vm161, 1.0, %v158
        %v164 = vrcp.pop %v163
        %v165 = vmul.f32 %v162, %v164
        %v166 = vsel %vm161, 1.0, %v162
        %v167 = vrcp.pop %v166
        %v168 = vsub.f32 %v158, %v152
        %v169 = vmul.f32 %v168, %v167
        %v170 = vsub.f32 %v158, %v154
        %v171 = vmul.f32 %v170, %v167
        %v172 = vsub.f32 %v158, %v156
        %v173 = vmul.f32 %v172, %v167
        %vm174 = vcmp.eq.f32.partialorder %v158, %v152
        %vm175 = vcmp.eq.f32.partialorder %v158, %v154
        %vm176 = vmxor %vm174, 1
        %v177 = vsub.f32 %v173, %v171
        %v178 = vsel %vm174, %v177, 0.0
        %vm179 = vmand %vm175, %vm176
        %v180 = vadd.f32 %v169, 2.0
        %v181 = vsub.f32 %v180, %v173
        %v182 = vsel %vm179, %v181, 0.0
        %vm183 = vmxor %vm175, 1
        %vm184 = vmand %vm183, %vm176
        %v185 = vadd.f32 %v171, 4.0
        %v186 = vsub.f32 %v185, %v169
        %v187 = vsel %vm184, %v186, 0.0
        %v188 = vadd.f32 %v178, %v182
        %v189 = vadd.f32 %v188, %v187
        %v190 = vmul.f32 %v189, 0.16666667
        %v191 = vadd.f32 %v190, 1.0
        %vm192 = vcmp.lt.f32.partialorder %v191, 0.0
        %v193 = vceil.f32 %v191
        %v194 = vfloor.f32 %v191
        %v195 = vsel %vm192, %v193, %v194
        %v196 = vsub.f32 %v191, %v195
        %197 = vst [vmem:[%s151] sm:$0x3] %v196
        %s198 = scalar_lea.vmem %s151, 2 [#allocation5]
        %199 = vst [vmem:[%s198] sm:$0x3] %v165
        %s200 = scalar_lea.vmem %s151, 4 [#allocation5]
        %201 = vst [vmem:[%s200] sm:$0x3] %v158
        %s202 = sand.u32 %s68, 1
        %s203 = scalar_lea.sflag [#allocation4], %s202
        %s204 = sand.u32 %s68, 1
        %s205 = smul.addr %s204, 6
        %s206 = scalar_lea.vmem [#allocation5], %s205
        // Predicated region
        $region29: #{tpu_custom_call.1} parent=23 // pred_check
          %p207 = pneg %p78
        $region30: #{tpu_custom_call.1} parent=23 // pred_check_branch
          %209 = sbr.rel (%p207) target = $region32
        $region31: #{tpu_custom_call.1} parent=23 // pred_region
          %s211 = ssub.s32 96, 96
          %212 = vsyncadd %s203, %s211
          %s213 = smul.addr %s22, 3
          %s214 = sadd.s32 %s23, %s213
          %s215 = smul.addr %s214, 32
          %s216 = scalar_lea.hbm %s1, %s215
          %s217 = sshll.u32 %s206, 4
          %s218 = int_to_ptr.vmem [resolvable:$true] %s217
          %223 = dma.vmem_to_hbm [thread:$0]  %s218, 96, %s216, %s203, 32, 32, 2
        $region32: #{tpu_custom_call.1} parent=23 // pred_fallthru
          _
      $region24: #{tpu_custom_call.1} parent=5 // pred_fallthru
        _
      %p224 = scmp.le.s32.totalorder 2, %s13
      // Predicated region
      $region33: #{tpu_custom_call.1} parent=5 // pred_check
        %p225 = pneg %p224
      $region34: #{tpu_custom_call.1} parent=5 // pred_check_branch
        %227 = sbr.rel (%p225) target = $region36
      $region35: #{tpu_custom_call.1} parent=5 // pred_region
        %s228 = ssub.s32 %s13, 2
        // Predicated region
        $region37: #{tpu_custom_call.1} parent=35 // pred_check
          %p229 = pneg %p84
        $region38: #{tpu_custom_call.1} parent=35 // pred_check_branch
          %231 = sbr.rel (%p229) target = $region40
        $region39: #{tpu_custom_call.1} parent=35 // pred_region
          %s232 = sand.u32 %s69, 1
          %s233 = scalar_lea.sflag [#allocation4], %s232
          %s234 = sand.u32 %s69, 1
          %s235 = smul.addr %s234, 6
          %s236 = scalar_lea.vmem [#allocation5], %s235
          %237 = dma.done %s233, 96
        $region40: #{tpu_custom_call.1} parent=35 // pred_fallthru
          _
      $region36: #{tpu_custom_call.1} parent=5 // pred_fallthru
        _
    $region6: #{tpu_custom_call.1} parent=1 // loop_footer
      %s17 = sadd.s32 1, %s13
    $region7: #{tpu_custom_call.1} parent=1 // loop_footer_branch
      %12 = sbr.rel target = $region3
    $region8: #{tpu_custom_call.1} parent=1 // loop_exit
      _
    %238 = vsyncpa [#allocation3], 1
    %s239 = scalar_lea.sflag [#allocation3], 1
    %240 = vsyncpa %s239, 1
    %241 = vsyncpa [#allocation4], 1
    %s242 = scalar_lea.sflag [#allocation4], 1
    %243 = vsyncpa %s242, 1

</llo_original>
